<compile_context>
chip_gen: v6e
topology: v6e:2x2x1
jax: 0.10.0
libtpu: 0.0.40
codegen_flags: <defaults>
</compile_context>

<pallas_src>
import jax
import jax.numpy as jnp
from jax.experimental import pallas as pl
from jax.experimental.pallas import tpu as pltpu


def _mish_kernel(x_ref, o_ref):
    x = x_ref[...].astype(jnp.float32)
    # mish(x) = x * tanh(softplus(x))
    # tanh(log(1 + t)) = ((1+t)^2 - 1) / ((1+t)^2 + 1) = (t^2 + 2t) / (t^2 + 2t + 2)
    # with t = exp(x). Clamp x before exp; for large x, mish(x) -> x.
    t = jnp.exp(jnp.minimum(x, 20.0))
    num = t * (t + 2.0)
    den = num + 2.0
    y = x * num * pl.reciprocal(den, approx=True)
    y = jnp.where(x > 20.0, x, y)
    o_ref[...] = y.astype(o_ref.dtype)


def mish_pallas(
    x: jax.Array,
    *,
    lane_width: int = 1024,
    target_block_bytes: int = 2 * 1024 * 1024,
) -> jax.Array:
    """Elementwise Mish: x * tanh(softplus(x)). Matches torch mish semantics."""
    orig_shape = x.shape
    orig_dtype = x.dtype

    total = int(x.size)
    itemsize = jnp.dtype(orig_dtype).itemsize
    # Sublane multiple: 8 rows for 4-byte, 16 for 2-byte, 32 for 1-byte dtypes.
    sub = max(8, (8 * 4) // itemsize)

    C = lane_width  # multiple of 128 (lane axis)

    # Rows needed to hold the data, rounded to a sublane multiple.
    rows_min = -(-total // C)
    rows_min = -(-rows_min // sub) * sub

    # Row-tile targeting ~target_block_bytes per block, sublane aligned.
    tr = max(sub, (target_block_bytes // (C * itemsize)) // sub * sub)
    tr = min(tr, rows_min)

    num_blocks = -(-rows_min // tr)
    rows = num_blocks * tr
    padded = rows * C

    flat = jnp.ravel(x)
    if padded != total:
        flat = jnp.pad(flat, (0, padded - total))  # mish(0) == 0 -> harmless
    x2d = flat.reshape(rows, C)

    out2d = pl.pallas_call(
        _mish_kernel,
        out_shape=jax.ShapeDtypeStruct((rows, C), orig_dtype),
        grid_spec=pltpu.PrefetchScalarGridSpec(
            num_scalar_prefetch=0,
            grid=(num_blocks,),
            in_specs=[pl.BlockSpec((tr, C), lambda i: (i, 0))],
            out_specs=pl.BlockSpec((tr, C), lambda i: (i, 0)),
        ),
        compiler_params=pltpu.CompilerParams(
            dimension_semantics=("parallel",)
        ),
    )(x2d)

    out_flat = out2d.reshape(-1)
    if padded != total:
        out_flat = out_flat[:total]
    return out_flat.reshape(orig_shape)


def _mish_ref(x):
    # Pure-JAX reference for correctness check.
    xf = x.astype(jnp.float32)
    return (xf * jnp.tanh(jax.nn.softplus(xf))).astype(x.dtype)


if __name__ == "__main__":
    key = jax.random.PRNGKey(0)
    # Small NCHW input, consistent with typical conv-net usage of Mish.
    x = jax.random.normal(key, (2, 4, 16, 16), dtype=jnp.float32) * 3.0

    y = mish_pallas(x)
    y = jax.block_until_ready(y)

    y_ref = _mish_ref(x)
    assert y.shape == x.shape and y.dtype == x.dtype
    # approx reciprocal => ~1e-3-level relative error; tolerance reflects that.
    assert jnp.allclose(y, y_ref, atol=1e-2, rtol=1e-2), "mismatch vs reference"

    print("KERNEL_OK")
</pallas_src>

<mosaic_0001>
module attributes {stable_mosaic.version = 11 : i64} {
  func.func @_mish_kernel(%arg0: i32, %arg1: memref<8x1024xf32, #tpu.memory_space<vmem>>, %arg2: memref<8x1024xf32, #tpu.memory_space<vmem>>) attributes {dimension_semantics = [#tpu.dimension_semantics<parallel>], iteration_bounds = array<i64: 1>, scalar_prefetch = 0 : i64, scratch_operands = 0 : i64, tpu.core_type = #tpu.core_type<tc>, window_params = [{transform_indices = @transform_0, window_bounds = array<i64: 8, 1024>}, {transform_indices = @transform_1, window_bounds = array<i64: 8, 1024>}]} {
    %c0 = arith.constant 0 : index
    %c0_0 = arith.constant 0 : index
    %0 = vector.load %arg1[%c0, %c0_0] : memref<8x1024xf32, #tpu.memory_space<vmem>>, vector<8x1024xf32>
    %cst = arith.constant 2.000000e+01 : f32
    %1 = vector.broadcast %cst : f32 to vector<8x1024xf32>
    %2 = arith.minimumf %0, %1 : vector<8x1024xf32>
    %3 = math.exp %2 : vector<8x1024xf32>
    %cst_1 = arith.constant 2.000000e+00 : f32
    %4 = vector.broadcast %cst_1 : f32 to vector<8x1024xf32>
    %5 = arith.addf %3, %4 : vector<8x1024xf32>
    %6 = arith.mulf %3, %5 : vector<8x1024xf32>
    %cst_2 = arith.constant 2.000000e+00 : f32
    %7 = vector.broadcast %cst_2 : f32 to vector<8x1024xf32>
    %8 = arith.addf %6, %7 : vector<8x1024xf32>
    %9 = arith.mulf %0, %6 : vector<8x1024xf32>
    %10 = tpu.reciprocal %8 {approx = true} : vector<8x1024xf32> -> vector<8x1024xf32>
    %11 = arith.mulf %9, %10 : vector<8x1024xf32>
    %cst_3 = arith.constant 2.000000e+01 : f32
    %12 = vector.broadcast %cst_3 : f32 to vector<8x1024xf32>
    %13 = arith.cmpf ogt, %0, %12 : vector<8x1024xf32>
    %14 = arith.select %13, %0, %11 : vector<8x1024xi1>, vector<8x1024xf32>
    %c0_4 = arith.constant 0 : index
    %c0_5 = arith.constant 0 : index
    %15 = vector.load %arg2[%c0_4, %c0_5] : memref<8x1024xf32, #tpu.memory_space<vmem>>, vector<8x1024xf32>
    tpu.vector_store %arg2[%c0_4, %c0_5], %14 {strides = array<i32>} : memref<8x1024xf32, #tpu.memory_space<vmem>>, vector<8x1024xf32>,
    return
  }
  func.func @transform_0(%arg0: i32) -> (i32, i32) {
    %c0_i32 = arith.constant 0 : i32
    %c0_i32_0 = arith.constant 0 : i32
    return %arg0, %c0_i32 : i32, i32
  }
  func.func @transform_1(%arg0: i32) -> (i32, i32) {
    %c0_i32 = arith.constant 0 : i32
    %c0_i32_0 = arith.constant 0 : i32
    return %arg0, %c0_i32 : i32, i32
  }
}

</mosaic_0001>

<llo_original>
// kernel: tpu_custom_call.1
$region0: #{tpu_custom_call.1}
  #allocation0 [shape = 'u32[]', space=smem, size = 0x4, offset = 0x4, fixed_abs, tag = 'smem constant byte address 0x4 - core index']
  #allocation1 [shape = 'u32[144,128]{1,0:T(1,128)}', space=vmem, size = 0x12000, scoped, tag = 'internal scratch']
  %s0 = inlined_call_operand.hbm [shape: f32[8,1024], index: 0, kind: input, shape index: {}]
  %s1 = inlined_call_operand.hbm [shape: f32[8,1024], index: 1, kind: output, shape index: {}]
  %s2 = sld [smem:[#allocation0]]
  $region18: #{tpu_custom_call.1} parent=0
    _
  %s4 = ssub.s32 1, %s2
  %s5 = scalar_select 0, %s4, %s2
  $region1: #{tpu_custom_call.1} parent=0
    #allocation2 [shape = 'u8[32768]{0}', space=vmem, size = 0x8000, scoped, tag = 'input window, operand 0, single buffered']
    #allocation3 [shape = 's32[1]{0}', space=sflag, size = 0x4, scoped, tag = 'scoped memory for tpu_custom_call.1']
    #allocation4 [shape = 's32[1]{0}', space=sflag, size = 0x4, scoped, tag = 'scoped memory for tpu_custom_call.1']
    #allocation5 [shape = 'u8[32768]{0}', space=vmem, size = 0x8000, scoped, tag = 'output window, operand 0, single buffered']
    %6 = vsyncpa [#allocation3], 0
    %7 = vsyncpa [#allocation4], 0
    // Predicated region
    $region2: #{tpu_custom_call.1} parent=1 // pred_check
      _
    $region3: #{tpu_custom_call.1} parent=1 // pred_check_branch
      %9 = sbr.rel (0) target = $region5
    $region4: #{tpu_custom_call.1} parent=1 // pred_region
      %s11 = ssub.s32 1024, 1024
      %12 = vsyncadd [#allocation3], %s11
      %s14 = sshll.u32 [#allocation2], 4
      %s15 = int_to_ptr.vmem [resolvable:$true] %s14
      %17 = dma.hbm_to_vmem [thread:$0]  %s0, 1024, %s15, [#allocation3]
    $region5: #{tpu_custom_call.1} parent=1 // pred_fallthru
      _
    // Predicated region
    $region6: #{tpu_custom_call.1} parent=1 // pred_check
      _
    $region7: #{tpu_custom_call.1} parent=1 // pred_check_branch
      %19 = sbr.rel (0) target = $region9
    $region8: #{tpu_custom_call.1} parent=1 // pred_region
      %20 = dma.done [#allocation3], 1024
    $region9: #{tpu_custom_call.1} parent=1 // pred_fallthru
      _
    %v21 = vld [vmem:[#allocation2] sm:$0xff]
    %v22 = vld [vmem:[#allocation2 + $0x8] sm:$0xff]
    %v23 = vld [vmem:[#allocation2 + $0x10] sm:$0xff]
    %v24 = vld [vmem:[#allocation2 + $0x18] sm:$0xff]
    %v25 = vld [vmem:[#allocation2 + $0x20] sm:$0xff]
    %v26 = vld [vmem:[#allocation2 + $0x28] sm:$0xff]
    %v27 = vld [vmem:[#allocation2 + $0x30] sm:$0xff]
    %v28 = vld [vmem:[#allocation2 + $0x38] sm:$0xff]
    %v29 = vmin.f32 %v21, 20.0
    %v30 = vmin.f32 %v22, 20.0
    %v31 = vmin.f32 %v23, 20.0
    %v32 = vmin.f32 %v24, 20.0
    %v33 = vmin.f32 %v25, 20.0
    %v34 = vmin.f32 %v26, 20.0
    %v35 = vmin.f32 %v27, 20.0
    %v36 = vmin.f32 %v28, 20.0
    %v37 = vmul.f32 %v29, 1.442695
    %v38 = vpow.pop %v37
    %v39 = vmul.f32 %v30, 1.442695
    %v40 = vpow.pop %v39
    %v41 = vmul.f32 %v31, 1.442695
    %v42 = vpow.pop %v41
    %v43 = vmul.f32 %v32, 1.442695
    %v44 = vpow.pop %v43
    %v45 = vmul.f32 %v33, 1.442695
    %v46 = vpow.pop %v45
    %v47 = vmul.f32 %v34, 1.442695
    %v48 = vpow.pop %v47
    %v49 = vmul.f32 %v35, 1.442695
    %v50 = vpow.pop %v49
    %v51 = vmul.f32 %v36, 1.442695
    %v52 = vpow.pop %v51
    %v53 = vadd.f32 %v38, 2.0
    %v54 = vadd.f32 %v40, 2.0
    %v55 = vadd.f32 %v42, 2.0
    %v56 = vadd.f32 %v44, 2.0
    %v57 = vadd.f32 %v46, 2.0
    %v58 = vadd.f32 %v48, 2.0
    %v59 = vadd.f32 %v50, 2.0
    %v60 = vadd.f32 %v52, 2.0
    %v61 = vmul.f32 %v38, %v53
    %v62 = vmul.f32 %v40, %v54
    %v63 = vmul.f32 %v42, %v55
    %v64 = vmul.f32 %v44, %v56
    %v65 = vmul.f32 %v46, %v57
    %v66 = vmul.f32 %v48, %v58
    %v67 = vmul.f32 %v50, %v59
    %v68 = vmul.f32 %v52, %v60
    %v69 = vadd.f32 %v61, 2.0
    %v70 = vadd.f32 %v62, 2.0
    %v71 = vadd.f32 %v63, 2.0
    %v72 = vadd.f32 %v64, 2.0
    %v73 = vadd.f32 %v65, 2.0
    %v74 = vadd.f32 %v66, 2.0
    %v75 = vadd.f32 %v67, 2.0
    %v76 = vadd.f32 %v68, 2.0
    %v77 = vmul.f32 %v21, %v61
    %v78 = vmul.f32 %v22, %v62
    %v79 = vmul.f32 %v23, %v63
    %v80 = vmul.f32 %v24, %v64
    %v81 = vmul.f32 %v25, %v65
    %v82 = vmul.f32 %v26, %v66
    %v83 = vmul.f32 %v27, %v67
    %v84 = vmul.f32 %v28, %v68
    %v85 = vrcp.pop %v69
    %v86 = vrcp.pop %v70
    %v87 = vrcp.pop %v71
    %v88 = vrcp.pop %v72
    %v89 = vrcp.pop %v73
    %v90 = vrcp.pop %v74
    %v91 = vrcp.pop %v75
    %v92 = vrcp.pop %v76
    %v93 = vmul.f32 %v77, %v85
    %v94 = vmul.f32 %v78, %v86
    %v95 = vmul.f32 %v79, %v87
    %v96 = vmul.f32 %v80, %v88
    %v97 = vmul.f32 %v81, %v89
    %v98 = vmul.f32 %v82, %v90
    %v99 = vmul.f32 %v83, %v91
    %v100 = vmul.f32 %v84, %v92
    %vm101 = vcmp.gt.f32.partialorder %v21, 20.0
    %vm102 = vcmp.gt.f32.partialorder %v22, 20.0
    %vm103 = vcmp.gt.f32.partialorder %v23, 20.0
    %vm104 = vcmp.gt.f32.partialorder %v24, 20.0
    %vm105 = vcmp.gt.f32.partialorder %v25, 20.0
    %vm106 = vcmp.gt.f32.partialorder %v26, 20.0
    %vm107 = vcmp.gt.f32.partialorder %v27, 20.0
    %vm108 = vcmp.gt.f32.partialorder %v28, 20.0
    %v109 = vsel %vm101, %v21, %v93
    %v110 = vsel %vm102, %v22, %v94
    %v111 = vsel %vm103, %v23, %v95
    %v112 = vsel %vm104, %v24, %v96
    %v113 = vsel %vm105, %v25, %v97
    %v114 = vsel %vm106, %v26, %v98
    %v115 = vsel %vm107, %v27, %v99
    %v116 = vsel %vm108, %v28, %v100
    %117 = vst [vmem:[#allocation5] sm:$0xff] %v109
    %118 = vst [vmem:[#allocation5 + $0x8] sm:$0xff] %v110
    %119 = vst [vmem:[#allocation5 + $0x10] sm:$0xff] %v111
    %120 = vst [vmem:[#allocation5 + $0x18] sm:$0xff] %v112
    %121 = vst [vmem:[#allocation5 + $0x20] sm:$0xff] %v113
    %122 = vst [vmem:[#allocation5 + $0x28] sm:$0xff] %v114
    %123 = vst [vmem:[#allocation5 + $0x30] sm:$0xff] %v115
    %124 = vst [vmem:[#allocation5 + $0x38] sm:$0xff] %v116
    // Predicated region
    $region10: #{tpu_custom_call.1} parent=1 // pred_check
      _
    $region11: #{tpu_custom_call.1} parent=1 // pred_check_branch
      %126 = sbr.rel (0) target = $region13
    $region12: #{tpu_custom_call.1} parent=1 // pred_region
      %s128 = ssub.s32 1024, 1024
      %129 = vsyncadd [#allocation4], %s128
      %s131 = sshll.u32 [#allocation5], 4
      %s132 = int_to_ptr.vmem [resolvable:$true] %s131
      %134 = dma.vmem_to_hbm [thread:$0]  %s132, 1024, %s1, [#allocation4]
    $region13: #{tpu_custom_call.1} parent=1 // pred_fallthru
      _
    // Predicated region
    $region14: #{tpu_custom_call.1} parent=1 // pred_check
      _
    $region15: #{tpu_custom_call.1} parent=1 // pred_check_branch
      %136 = sbr.rel (0) target = $region17
    $region16: #{tpu_custom_call.1} parent=1 // pred_region
      %137 = dma.done [#allocation4], 1024
    $region17: #{tpu_custom_call.1} parent=1 // pred_fallthru
      _
    %138 = vsyncpa [#allocation3], 1
    %139 = vsyncpa [#allocation4], 1

</llo_original>
